<compile_context>
chip_gen: v7x
topology: tpu7x:2x2x1
jax: 0.10.0
libtpu: 0.0.40
codegen_flags: <defaults>
</compile_context>

<pallas_src>
import jax
import jax.numpy as jnp
from jax import lax
from jax.experimental import pallas as pl
from jax.experimental.pallas import tpu as pltpu


def policy_net_kernel(xt_ref, w1_ref, b1_ref, wd_ref, bd_ref, o_ref):
    xt = xt_ref[...]          # (4, TB)   lane-dense batch tile
    w1 = w1_ref[...]          # (128, 4)  PyTorch (out, in) layout

    # affine1 + ReLU as VPU broadcast-MACs (K=4 would waste the MXU).
    h = (w1[:, 0:1] * xt[0:1, :]
         + w1[:, 1:2] * xt[1:2, :]
         + w1[:, 2:3] * xt[2:3, :]
         + w1[:, 3:4] * xt[3:4, :])                      # (128, TB)
    h = jnp.maximum(h + b1_ref[...], 0.0)                # b1 (128,1) broadcast

    # 2-class head: softmax over 2 logits == sigmoid of their difference.
    #   d = (w2[0]-w2[1]) @ h + (b2[0]-b2[1]);  p0 = sigmoid(d); p1 = 1 - p0
    d = jnp.dot(wd_ref[...], h, preferred_element_type=jnp.float32)  # (1, TB)
    d = d + bd_ref[...]
    p0 = 1.0 / (1.0 + jnp.exp(-d))
    o_ref[0:1, :] = p0
    o_ref[1:2, :] = 1.0 - p0


def policy_net_forward(x, w1, b1, w2, b2, *, tb=512):
    """x: (B, 4) f32; params in PyTorch layout: w1 (128, 4), b1 (128,),
    w2 (2, 128), b2 (2,).  Returns softmax action probabilities (B, 2)."""
    B = x.shape[0]
    n_tiles = pl.cdiv(B, tb)
    b_pad = n_tiles * tb

    # Lane-dense input (4, B_pad); zero-pad the batch tail (sliced off below).
    xt = jnp.pad(x.astype(jnp.float32), ((0, b_pad - B), (0, 0))).T
    b1c = b1.reshape(128, 1).astype(jnp.float32)
    wd = (w2[0, :] - w2[1, :]).reshape(1, 128).astype(jnp.float32)
    bd = (b2[0] - b2[1]).reshape(1, 1).astype(jnp.float32)

    out = pl.pallas_call(
        policy_net_kernel,
        out_shape=jax.ShapeDtypeStruct((2, b_pad), jnp.float32),
        grid=(n_tiles,),
        in_specs=[
            pl.BlockSpec((4, tb), lambda i: (0, i)),      # x tile (lane-dense)
            pl.BlockSpec((128, 4), lambda i: (0, 0)),     # w1 (VMEM-resident)
            pl.BlockSpec((128, 1), lambda i: (0, 0)),     # b1
            pl.BlockSpec((1, 128), lambda i: (0, 0)),     # w2 row difference
            pl.BlockSpec((1, 1), lambda i: (0, 0)),       # b2 difference
        ],
        out_specs=pl.BlockSpec((2, tb), lambda i: (0, i)),
        compiler_params=pltpu.CompilerParams(
            dimension_semantics=("parallel",)),
    )(xt, w1.astype(jnp.float32), b1c, wd, bd)

    return out[:, :B].T                                    # (B, 2)


def init_params(key):
    # Deterministic init mimicking PyTorch nn.Linear default:
    # U(-1/sqrt(fan_in), 1/sqrt(fan_in)); weights kept in PyTorch (out, in).
    k1, k2, k3, k4 = jax.random.split(key, 4)
    bound1 = 1.0 / jnp.sqrt(4.0)
    w1 = jax.random.uniform(k1, (128, 4), jnp.float32, -bound1, bound1)
    b1 = jax.random.uniform(k2, (128,), jnp.float32, -bound1, bound1)
    bound2 = 1.0 / jnp.sqrt(128.0)
    w2 = jax.random.uniform(k3, (2, 128), jnp.float32, -bound2, bound2)
    b2 = jax.random.uniform(k4, (2,), jnp.float32, -bound2, bound2)
    return w1, b1, w2, b2


if __name__ == "__main__":
    key = jax.random.PRNGKey(0)
    kx, kp = jax.random.split(key)
    B = 2
    x = jax.random.normal(kx, (B, 4), jnp.float32)   # CartPole obs dim = 4
    w1, b1, w2, b2 = init_params(kp)

    out = policy_net_forward(x, w1, b1, w2, b2)
    out = jax.block_until_ready(out)

    # Reference check in plain JAX (highest precision so the comparison is on
    # semantics, not XLA's default bf16 matmul passes).
    h = jnp.maximum(jnp.dot(x, w1.T, precision=lax.Precision.HIGHEST) + b1, 0.0)
    scores = jnp.dot(h, w2.T, precision=lax.Precision.HIGHEST) + b2
    ref = jax.nn.softmax(scores, axis=1)

    assert out.shape == (B, 2)
    assert jnp.allclose(out, ref, atol=1e-5, rtol=1e-5)
    assert jnp.allclose(jnp.sum(out, axis=1), 1.0, atol=1e-5)

    print("KERNEL_OK")
</pallas_src>

<mosaic_0001>
module attributes {stable_mosaic.version = 11 : i64} {
  func.func @policy_net_kernel(%arg0: i32, %arg1: memref<4x512xf32, #tpu.memory_space<vmem>>, %arg2: memref<128x4xf32, #tpu.memory_space<vmem>>, %arg3: memref<128x1xf32, #tpu.memory_space<vmem>>, %arg4: memref<1x128xf32, #tpu.memory_space<vmem>>, %arg5: memref<1x1xf32, #tpu.memory_space<vmem>>, %arg6: memref<2x512xf32, #tpu.memory_space<vmem>>) attributes {dimension_semantics = [#tpu.dimension_semantics<parallel>], iteration_bounds = array<i64: 1>, scalar_prefetch = 0 : i64, scratch_operands = 0 : i64, tpu.core_type = #tpu.core_type<tc>, window_params = [{transform_indices = @transform_0, window_bounds = array<i64: 4, 512>}, {pipeline_mode = #tpu.pipeline_mode<synchronous>, transform_indices = @transform_1, window_bounds = array<i64: 128, 4>}, {pipeline_mode = #tpu.pipeline_mode<synchronous>, transform_indices = @transform_2, window_bounds = array<i64: 128, 1>}, {pipeline_mode = #tpu.pipeline_mode<synchronous>, transform_indices = @transform_3, window_bounds = array<i64: 1, 128>}, {pipeline_mode = #tpu.pipeline_mode<synchronous>, transform_indices = @transform_4, window_bounds = array<i64: 1, 1>}, {transform_indices = @transform_5, window_bounds = array<i64: 2, 512>}]} {
    %c0 = arith.constant 0 : index
    %c0_0 = arith.constant 0 : index
    %0 = vector.load %arg1[%c0, %c0_0] : memref<4x512xf32, #tpu.memory_space<vmem>>, vector<4x512xf32>
    %c0_1 = arith.constant 0 : index
    %c0_2 = arith.constant 0 : index
    %1 = vector.load %arg2[%c0_1, %c0_2] : memref<128x4xf32, #tpu.memory_space<vmem>>, vector<128x4xf32>
    %2 = vector.extract_strided_slice %1 {offsets = [0, 0], sizes = [128, 1], strides = [1, 1]} : vector<128x4xf32> to vector<128x1xf32>
    %3 = vector.extract_strided_slice %0 {offsets = [0, 0], sizes = [1, 512], strides = [1, 1]} : vector<4x512xf32> to vector<1x512xf32>
    %4 = vector.broadcast %2 : vector<128x1xf32> to vector<128x512xf32>
    %5 = vector.broadcast %3 : vector<1x512xf32> to vector<128x512xf32>
    %6 = arith.mulf %4, %5 : vector<128x512xf32>
    %7 = vector.extract_strided_slice %1 {offsets = [0, 1], sizes = [128, 1], strides = [1, 1]} : vector<128x4xf32> to vector<128x1xf32>
    %8 = vector.extract_strided_slice %0 {offsets = [1, 0], sizes = [1, 512], strides = [1, 1]} : vector<4x512xf32> to vector<1x512xf32>
    %9 = vector.broadcast %7 : vector<128x1xf32> to vector<128x512xf32>
    %10 = vector.broadcast %8 : vector<1x512xf32> to vector<128x512xf32>
    %11 = arith.mulf %9, %10 : vector<128x512xf32>
    %12 = arith.addf %6, %11 : vector<128x512xf32>
    %13 = vector.extract_strided_slice %1 {offsets = [0, 2], sizes = [128, 1], strides = [1, 1]} : vector<128x4xf32> to vector<128x1xf32>
    %14 = vector.extract_strided_slice %0 {offsets = [2, 0], sizes = [1, 512], strides = [1, 1]} : vector<4x512xf32> to vector<1x512xf32>
    %15 = vector.broadcast %13 : vector<128x1xf32> to vector<128x512xf32>
    %16 = vector.broadcast %14 : vector<1x512xf32> to vector<128x512xf32>
    %17 = arith.mulf %15, %16 : vector<128x512xf32>
    %18 = arith.addf %12, %17 : vector<128x512xf32>
    %19 = vector.extract_strided_slice %1 {offsets = [0, 3], sizes = [128, 1], strides = [1, 1]} : vector<128x4xf32> to vector<128x1xf32>
    %20 = vector.extract_strided_slice %0 {offsets = [3, 0], sizes = [1, 512], strides = [1, 1]} : vector<4x512xf32> to vector<1x512xf32>
    %21 = vector.broadcast %19 : vector<128x1xf32> to vector<128x512xf32>
    %22 = vector.broadcast %20 : vector<1x512xf32> to vector<128x512xf32>
    %23 = arith.mulf %21, %22 : vector<128x512xf32>
    %24 = arith.addf %18, %23 : vector<128x512xf32>
    %c0_3 = arith.constant 0 : index
    %c0_4 = arith.constant 0 : index
    %25 = vector.load %arg3[%c0_3, %c0_4] : memref<128x1xf32, #tpu.memory_space<vmem>>, vector<128x1xf32>
    %26 = vector.broadcast %25 : vector<128x1xf32> to vector<128x512xf32>
    %27 = arith.addf %24, %26 : vector<128x512xf32>
    %cst = arith.constant 0.000000e+00 : f32
    %28 = vector.broadcast %cst : f32 to vector<128x512xf32>
    %29 = arith.maximumf %27, %28 : vector<128x512xf32>
    %c0_5 = arith.constant 0 : index
    %c0_6 = arith.constant 0 : index
    %30 = vector.load %arg4[%c0_5, %c0_6] : memref<1x128xf32, #tpu.memory_space<vmem>>, vector<1x128xf32>
    %cst_7 = arith.constant dense<0.000000e+00> : vector<1x512xf32>
    %31 = tpu.matmul %30, %29, %cst_7 {dimension_numbers = #tpu.dot_dimension_numbers<[1], [0], [0], [1], [0, 0, 1, 1], [], []>} : vector<1x128xf32>, vector<128x512xf32>, vector<1x512xf32> -> vector<1x512xf32>
    %c0_8 = arith.constant 0 : index
    %c0_9 = arith.constant 0 : index
    %32 = vector.load %arg5[%c0_8, %c0_9] : memref<1x1xf32, #tpu.memory_space<vmem>>, vector<1x1xf32>
    %33 = vector.broadcast %32 : vector<1x1xf32> to vector<1x512xf32>
    %34 = arith.addf %31, %33 : vector<1x512xf32>
    %cst_10 = arith.constant 0.000000e+00 : f32
    %35 = vector.broadcast %cst_10 : f32 to vector<1x512xf32>
    %36 = arith.subf %35, %34 : vector<1x512xf32>
    %37 = math.exp %36 : vector<1x512xf32>
    %cst_11 = arith.constant 1.000000e+00 : f32
    %38 = vector.broadcast %cst_11 : f32 to vector<1x512xf32>
    %39 = arith.addf %38, %37 : vector<1x512xf32>
    %cst_12 = arith.constant 1.000000e+00 : f32
    %40 = vector.broadcast %cst_12 : f32 to vector<1x512xf32>
    %41 = arith.divf %40, %39 : vector<1x512xf32>
    %c0_13 = arith.constant 0 : index
    %c0_14 = arith.constant 0 : index
    %42 = vector.load %arg6[%c0_13, %c0_14] : memref<2x512xf32, #tpu.memory_space<vmem>>, vector<1x512xf32>
    tpu.vector_store %arg6[%c0_13, %c0_14], %41 {strides = array<i32>} : memref<2x512xf32, #tpu.memory_space<vmem>>, vector<1x512xf32>,
    %cst_15 = arith.constant 1.000000e+00 : f32
    %43 = vector.broadcast %cst_15 : f32 to vector<1x512xf32>
    %44 = arith.subf %43, %41 : vector<1x512xf32>
    %c1 = arith.constant 1 : index
    %c0_16 = arith.constant 0 : index
    %45 = vector.load %arg6[%c1, %c0_16] : memref<2x512xf32, #tpu.memory_space<vmem>>, vector<1x512xf32>
    tpu.vector_store %arg6[%c1, %c0_16], %44 {strides = array<i32>} : memref<2x512xf32, #tpu.memory_space<vmem>>, vector<1x512xf32>,
    return
  }
  func.func @transform_0(%arg0: i32) -> (i32, i32) {
    %c0_i32 = arith.constant 0 : i32
    %c0_i32_0 = arith.constant 0 : i32
    return %c0_i32, %arg0 : i32, i32
  }
  func.func @transform_1(%arg0: i32) -> (i32, i32) {
    %c0_i32 = arith.constant 0 : i32
    %c0_i32_0 = arith.constant 0 : i32
    %c0_i32_1 = arith.constant 0 : i32
    return %c0_i32, %c0_i32_0 : i32, i32
  }
  func.func @transform_2(%arg0: i32) -> (i32, i32) {
    %c0_i32 = arith.constant 0 : i32
    %c0_i32_0 = arith.constant 0 : i32
    %c0_i32_1 = arith.constant 0 : i32
    return %c0_i32, %c0_i32_0 : i32, i32
  }
  func.func @transform_3(%arg0: i32) -> (i32, i32) {
    %c0_i32 = arith.constant 0 : i32
    %c0_i32_0 = arith.constant 0 : i32
    %c0_i32_1 = arith.constant 0 : i32
    return %c0_i32, %c0_i32_0 : i32, i32
  }
  func.func @transform_4(%arg0: i32) -> (i32, i32) {
    %c0_i32 = arith.constant 0 : i32
    %c0_i32_0 = arith.constant 0 : i32
    %c0_i32_1 = arith.constant 0 : i32
    return %c0_i32, %c0_i32_0 : i32, i32
  }
  func.func @transform_5(%arg0: i32) -> (i32, i32) {
    %c0_i32 = arith.constant 0 : i32
    %c0_i32_0 = arith.constant 0 : i32
    return %c0_i32, %arg0 : i32, i32
  }
}

</mosaic_0001>

<llo_original>
// kernel: tpu_custom_call.1
$region0: #{tpu_custom_call.1}
  #allocation0 [shape = 'u32[]', space=smem, size = 0x4, offset = 0x4, fixed_abs, tag = 'smem constant byte address 0x4 - core index']
  #allocation1 [shape = 'u32[144,128]{1,0:T(1,128)}', space=vmem, size = 0x12000, scoped, tag = 'internal scratch']
  #allocation2 [shape = 'f32[1,1]{1,0:T(1,128)S(1)}', space=vmem, size = 0x200, scoped, tag = 'scoped memory for tpu_custom_call.1']
  %s0 = inlined_call_operand.vmem [shape: f32[4,512], index: 0, kind: input, shape index: {}]
  %s1 = inlined_call_operand.vmem [shape: f32[128,4], index: 1, kind: input, shape index: {}]
  %s2 = inlined_call_operand.vmem [shape: f32[128,1], index: 2, kind: input, shape index: {}]
  %s3 = inlined_call_operand.vmem [shape: f32[1,128], index: 3, kind: input, shape index: {}]
  %s4 = inlined_call_operand.<no memory space> [shape: f32[1,1], index: 4, kind: input, shape index: {}]
  %s5 = inlined_call_operand.hbm [shape: f32[2,512], index: 5, kind: output, shape index: {}]
  %s6 = sld [smem:[#allocation0]]
  $region30: #{tpu_custom_call.1} parent=0
    _
  %s8 = ssub.s32 1, %s6
  %s9 = scalar_select 0, %s8, %s6
  %v10 = vstv %s4
  %11 = vst [vmem:[#allocation2] sm:$0x1] %v10
  $region1: #{tpu_custom_call.1} parent=0
    #allocation3 [shape = 'u8[4096]{0}', space=vmem, size = 0x1000, scoped, tag = 'output window, operand 0, single buffered']
    #allocation4 [shape = 's32[1]{0}', space=sflag, size = 0x4, scoped, tag = 'scoped memory for tpu_custom_call.1']
    %12 = vsyncpa [#allocation4], 0
    // Predicated region
    $region2: #{tpu_custom_call.1} parent=1 // pred_check
      _
    $region3: #{tpu_custom_call.1} parent=1 // pred_check_branch
      %14 = sbr.rel (0) target = $region5
    $region4: #{tpu_custom_call.1} parent=1 // pred_region
      _
    $region5: #{tpu_custom_call.1} parent=1 // pred_fallthru
      _
    // Predicated region
    $region6: #{tpu_custom_call.1} parent=1 // pred_check
      _
    $region7: #{tpu_custom_call.1} parent=1 // pred_check_branch
      %16 = sbr.rel (0) target = $region9
    $region8: #{tpu_custom_call.1} parent=1 // pred_region
      _
    $region9: #{tpu_custom_call.1} parent=1 // pred_fallthru
      _
    // Predicated region
    $region10: #{tpu_custom_call.1} parent=1 // pred_check
      _
    $region11: #{tpu_custom_call.1} parent=1 // pred_check_branch
      %18 = sbr.rel (0) target = $region13
    $region12: #{tpu_custom_call.1} parent=1 // pred_region
      _
    $region13: #{tpu_custom_call.1} parent=1 // pred_fallthru
      _
    // Predicated region
    $region14: #{tpu_custom_call.1} parent=1 // pred_check
      _
    $region15: #{tpu_custom_call.1} parent=1 // pred_check_branch
      %20 = sbr.rel (0) target = $region17
    $region16: #{tpu_custom_call.1} parent=1 // pred_region
      _
    $region17: #{tpu_custom_call.1} parent=1 // pred_fallthru
      _
    // Predicated region
    $region18: #{tpu_custom_call.1} parent=1 // pred_check
      _
    $region19: #{tpu_custom_call.1} parent=1 // pred_check_branch
      %22 = sbr.rel (0) target = $region21
    $region20: #{tpu_custom_call.1} parent=1 // pred_region
      _
    $region21: #{tpu_custom_call.1} parent=1 // pred_fallthru
      _
    %v23 = vld [vmem:[%s0] sm:$0xff]
    %v24 = vld [vmem:[%s0 + $0x8] sm:$0xff]
    %v25 = vld [vmem:[%s1] sm:$0xff]
    %v26 = vld [vmem:[%s1 + $0x8] sm:$0xff]
    %v27 = vld [vmem:[%s1 + $0x10] sm:$0xff]
    %v28 = vld [vmem:[%s1 + $0x18] sm:$0xff]
    %v29 = vld [vmem:[%s1 + $0x20] sm:$0xff]
    %v30 = vld [vmem:[%s1 + $0x28] sm:$0xff]
    %v31 = vld [vmem:[%s1 + $0x30] sm:$0xff]
    %v32 = vld [vmem:[%s1 + $0x38] sm:$0xff]
    %v33 = vld [vmem:[%s1 + $0x40] sm:$0xff]
    %v34 = vld [vmem:[%s1 + $0x48] sm:$0xff]
    %v35 = vld [vmem:[%s1 + $0x50] sm:$0xff]
    %v36 = vld [vmem:[%s1 + $0x58] sm:$0xff]
    %v37 = vld [vmem:[%s1 + $0x60] sm:$0xff]
    %v38 = vld [vmem:[%s1 + $0x68] sm:$0xff]
    %v39 = vld [vmem:[%s1 + $0x70] sm:$0xff]
    %v40 = vld [vmem:[%s1 + $0x78] sm:$0xff]
    %42 = vset.pattern.permute.xlu0 0
    %43 = vperm.xlu0 %42, %v25
    %v44 = vpop.permute.xlu0 %43
    %47 = vset.pattern.permute.xlu0 0
    %48 = vperm.xlu0 %47, %v26
    %v49 = vpop.permute.xlu0 %48
    %52 = vset.pattern.permute.xlu0 0
    %53 = vperm.xlu0 %52, %v27
    %v54 = vpop.permute.xlu0 %53
    %57 = vset.pattern.permute.xlu0 0
    %58 = vperm.xlu0 %57, %v28
    %v59 = vpop.permute.xlu0 %58
    %62 = vset.pattern.permute.xlu0 0
    %63 = vperm.xlu0 %62, %v29
    %v64 = vpop.permute.xlu0 %63
    %67 = vset.pattern.permute.xlu0 0
    %68 = vperm.xlu0 %67, %v30
    %v69 = vpop.permute.xlu0 %68
    %72 = vset.pattern.permute.xlu0 0
    %73 = vperm.xlu0 %72, %v31
    %v74 = vpop.permute.xlu0 %73
    %77 = vset.pattern.permute.xlu0 0
    %78 = vperm.xlu0 %77, %v32
    %v79 = vpop.permute.xlu0 %78
    %82 = vset.pattern.permute.xlu0 0
    %83 = vperm.xlu0 %82, %v33
    %v84 = vpop.permute.xlu0 %83
    %87 = vset.pattern.permute.xlu0 0
    %88 = vperm.xlu0 %87, %v34
    %v89 = vpop.permute.xlu0 %88
    %92 = vset.pattern.permute.xlu0 0
    %93 = vperm.xlu0 %92, %v35
    %v94 = vpop.permute.xlu0 %93
    %97 = vset.pattern.permute.xlu0 0
    %98 = vperm.xlu0 %97, %v36
    %v99 = vpop.permute.xlu0 %98
    %102 = vset.pattern.permute.xlu0 0
    %103 = vperm.xlu0 %102, %v37
    %v104 = vpop.permute.xlu0 %103
    %107 = vset.pattern.permute.xlu0 0
    %108 = vperm.xlu0 %107, %v38
    %v109 = vpop.permute.xlu0 %108
    %112 = vset.pattern.permute.xlu0 0
    %113 = vperm.xlu0 %112, %v39
    %v114 = vpop.permute.xlu0 %113
    %117 = vset.pattern.permute.xlu0 0
    %118 = vperm.xlu0 %117, %v40
    %v119 = vpop.permute.xlu0 %118
    %v123 = vlaneseq
    %v124 = vshrl.u32 %v123, 7
    %v125 = vsub.s32 0, %v124
    %v126 = vrot.slane %v23, %v125
    %v127 = vlaneseq
    %v128 = vshrl.u32 %v127, 7
    %v129 = vsub.s32 4, %v128
    %v130 = vrot.slane %v23, %v129
    %v131 = vlaneseq
    %v132 = vshrl.u32 %v131, 7
    %v133 = vsub.s32 0, %v132
    %v134 = vrot.slane %v24, %v133
    %v135 = vlaneseq
    %v136 = vshrl.u32 %v135, 7
    %v137 = vsub.s32 4, %v136
    %v138 = vrot.slane %v24, %v137
    %v143 = vlaneseq
    %v144 = vshrl.u32 %v143, 7
    %v145 = vsub.s32 0, %v144
    %v146 = vrot.slane %v126, %v145
    %v147 = vlaneseq
    %v148 = vshrl.u32 %v147, 7
    %v149 = vsub.s32 0, %v148
    %v150 = vrot.slane %v130, %v149
    %v151 = vlaneseq
    %v152 = vshrl.u32 %v151, 7
    %v153 = vsub.s32 0, %v152
    %v154 = vrot.slane %v134, %v153
    %v155 = vlaneseq
    %v156 = vshrl.u32 %v155, 7
    %v157 = vsub.s32 0, %v156
    %v158 = vrot.slane %v138, %v157
    %v159 = vmul.f32 %v44, %v146
    %v160 = vmul.f32 %v44, %v150
    %v161 = vmul.f32 %v44, %v154
    %v162 = vmul.f32 %v44, %v158
    %v163 = vmul.f32 %v49, %v146
    %v164 = vmul.f32 %v49, %v150
    %v165 = vmul.f32 %v49, %v154
    %v166 = vmul.f32 %v49, %v158
    %v167 = vmul.f32 %v54, %v146
    %v168 = vmul.f32 %v54, %v150
    %v169 = vmul.f32 %v54, %v154
    %v170 = vmul.f32 %v54, %v158
    %v171 = vmul.f32 %v59, %v146
    %v172 = vmul.f32 %v59, %v150
    %v173 = vmul.f32 %v59, %v154
    %v174 = vmul.f32 %v59, %v158
    %v175 = vmul.f32 %v64, %v146
    %v176 = vmul.f32 %v64, %v150
    %v177 = vmul.f32 %v64, %v154
    %v178 = vmul.f32 %v64, %v158
    %v179 = vmul.f32 %v69, %v146
    %v180 = vmul.f32 %v69, %v150
    %v181 = vmul.f32 %v69, %v154
    %v182 = vmul.f32 %v69, %v158
    %v183 = vmul.f32 %v74, %v146
    %v184 = vmul.f32 %v74, %v150
    %v185 = vmul.f32 %v74, %v154
    %v186 = vmul.f32 %v74, %v158
    %v187 = vmul.f32 %v79, %v146
    %v188 = vmul.f32 %v79, %v150
    %v189 = vmul.f32 %v79, %v154
    %v190 = vmul.f32 %v79, %v158
    %v191 = vmul.f32 %v84, %v146
    %v192 = vmul.f32 %v84, %v150
    %v193 = vmul.f32 %v84, %v154
    %v194 = vmul.f32 %v84, %v158
    %v195 = vmul.f32 %v89, %v146
    %v196 = vmul.f32 %v89, %v150
    %v197 = vmul.f32 %v89, %v154
    %v198 = vmul.f32 %v89, %v158
    %v199 = vmul.f32 %v94, %v146
    %v200 = vmul.f32 %v94, %v150
    %v201 = vmul.f32 %v94, %v154
    %v202 = vmul.f32 %v94, %v158
    %v203 = vmul.f32 %v99, %v146
    %v204 = vmul.f32 %v99, %v150
    %v205 = vmul.f32 %v99, %v154
    %v206 = vmul.f32 %v99, %v158
    %v207 = vmul.f32 %v104, %v146
    %v208 = vmul.f32 %v104, %v150
    %v209 = vmul.f32 %v104, %v154
    %v210 = vmul.f32 %v104, %v158
    %v211 = vmul.f32 %v109, %v146
    %v212 = vmul.f32 %v109, %v150
    %v213 = vmul.f32 %v109, %v154
    %v214 = vmul.f32 %v109, %v158
    %v215 = vmul.f32 %v114, %v146
    %v216 = vmul.f32 %v114, %v150
    %v217 = vmul.f32 %v114, %v154
    %v218 = vmul.f32 %v114, %v158
    %v219 = vmul.f32 %v119, %v146
    %v220 = vmul.f32 %v119, %v150
    %v221 = vmul.f32 %v119, %v154
    %v222 = vmul.f32 %v119, %v158
    %223 = vset.pattern.permute.xlu0 1
    %224 = vperm.xlu0 %223, %v25
    %v225 = vpop.permute.xlu0 %224
    %227 = vset.pattern.permute.xlu0 1
    %228 = vperm.xlu0 %227, %v26
    %v229 = vpop.permute.xlu0 %228
    %231 = vset.pattern.permute.xlu0 1
    %232 = vperm.xlu0 %231, %v27
    %v233 = vpop.permute.xlu0 %232
    %235 = vset.pattern.permute.xlu0 1
    %236 = vperm.xlu0 %235, %v28
    %v237 = vpop.permute.xlu0 %236
    %239 = vset.pattern.permute.xlu0 1
    %240 = vperm.xlu0 %239, %v29
    %v241 = vpop.permute.xlu0 %240
    %243 = vset.pattern.permute.xlu0 1
    %244 = vperm.xlu0 %243, %v30
    %v245 = vpop.permute.xlu0 %244
    %247 = vset.pattern.permute.xlu0 1
    %248 = vperm.xlu0 %247, %v31
    %v249 = vpop.permute.xlu0 %248
    %251 = vset.pattern.permute.xlu0 1
    %252 = vperm.xlu0 %251, %v32
    %v253 = vpop.permute.xlu0 %252
    %255 = vset.pattern.permute.xlu0 1
    %256 = vperm.xlu0 %255, %v33
    %v257 = vpop.permute.xlu0 %256
    %259 = vset.pattern.permute.xlu0 1
    %260 = vperm.xlu0 %259, %v34
    %v261 = vpop.permute.xlu0 %260
    %263 = vset.pattern.permute.xlu0 1
    %264 = vperm.xlu0 %263, %v35
    %v265 = vpop.permute.xlu0 %264
    %267 = vset.pattern.permute.xlu0 1
    %268 = vperm.xlu0 %267, %v36
    %v269 = vpop.permute.xlu0 %268
    %271 = vset.pattern.permute.xlu0 1
    %272 = vperm.xlu0 %271, %v37
    %v273 = vpop.permute.xlu0 %272
    %275 = vset.pattern.permute.xlu0 1
    %276 = vperm.xlu0 %275, %v38
    %v277 = vpop.permute.xlu0 %276
    %279 = vset.pattern.permute.xlu0 1
    %280 = vperm.xlu0 %279, %v39
    %v281 = vpop.permute.xlu0 %280
    %283 = vset.pattern.permute.xlu0 1
    %284 = vperm.xlu0 %283, %v40
    %v285 = vpop.permute.xlu0 %284
    %v287 = vlaneseq
    %v288 = vshrl.u32 %v287, 7
    %v289 = vsub.s32 1, %v288
    %v290 = vrot.slane %v23, %v289
    %v291 = vlaneseq
    %v292 = vshrl.u32 %v291, 7
    %v293 = vsub.s32 5, %v292
    %v294 = vrot.slane %v23, %v293
    %v295 = vlaneseq
    %v296 = vshrl.u32 %v295, 7
    %v297 = vsub.s32 1, %v296
    %v298 = vrot.slane %v24, %v297
    %v299 = vlaneseq
    %v300 = vshrl.u32 %v299, 7
    %v301 = vsub.s32 5, %v300
    %v302 = vrot.slane %v24, %v301
    %v307 = vlaneseq
    %v308 = vshrl.u32 %v307, 7
    %v309 = vsub.s32 1, %v308
    %v310 = vrot.slane %v290, %v309
    %v311 = vlaneseq
    %v312 = vshrl.u32 %v311, 7
    %v313 = vsub.s32 1, %v312
    %v314 = vrot.slane %v294, %v313
    %v315 = vlaneseq
    %v316 = vshrl.u32 %v315, 7
    %v317 = vsub.s32 1, %v316
    %v318 = vrot.slane %v298, %v317
    %v319 = vlaneseq
    %v320 = vshrl.u32 %v319, 7
    %v321 = vsub.s32 1, %v320
    %v322 = vrot.slane %v302, %v321
    %v323 = vmul.f32 %v225, %v310
    %v324 = vmul.f32 %v225, %v314
    %v325 = vmul.f32 %v225, %v318
    %v326 = vmul.f32 %v225, %v322
    %v327 = vmul.f32 %v229, %v310
    %v328 = vmul.f32 %v229, %v314
    %v329 = vmul.f32 %v229, %v318
    %v330 = vmul.f32 %v229, %v322
    %v331 = vmul.f32 %v233, %v310
    %v332 = vmul.f32 %v233, %v314
    %v333 = vmul.f32 %v233, %v318
    %v334 = vmul.f32 %v233, %v322
    %v335 = vmul.f32 %v237, %v310
    %v336 = vmul.f32 %v237, %v314
    %v337 = vmul.f32 %v237, %v318
    %v338 = vmul.f32 %v237, %v322
    %v339 = vmul.f32 %v241, %v310
    %v340 = vmul.f32 %v241, %v314
    %v341 = vmul.f32 %v241, %v318
    %v342 = vmul.f32 %v241, %v322
    %v343 = vmul.f32 %v245, %v310
    %v344 = vmul.f32 %v245, %v314
    %v345 = vmul.f32 %v245, %v318
    %v346 = vmul.f32 %v245, %v322
    %v347 = vmul.f32 %v249, %v310
    %v348 = vmul.f32 %v249, %v314
    %v349 = vmul.f32 %v249, %v318
    %v350 = vmul.f32 %v249, %v322
    %v351 = vmul.f32 %v253, %v310
    %v352 = vmul.f32 %v253, %v314
    %v353 = vmul.f32 %v253, %v318
    %v354 = vmul.f32 %v253, %v322
    %v355 = vmul.f32 %v257, %v310
    %v356 = vmul.f32 %v257, %v314
    %v357 = vmul.f32 %v257, %v318
    %v358 = vmul.f32 %v257, %v322
    %v359 = vmul.f32 %v261, %v310
    %v360 = vmul.f32 %v261, %v314
    %v361 = vmul.f32 %v261, %v318
    %v362 = vmul.f32 %v261, %v322
    %v363 = vmul.f32 %v265, %v310
    %v364 = vmul.f32 %v265, %v314
    %v365 = vmul.f32 %v265, %v318
    %v366 = vmul.f32 %v265, %v322
    %v367 = vmul.f32 %v269, %v310
    %v368 = vmul.f32 %v269, %v314
    %v369 = vmul.f32 %v269, %v318
    %v370 = vmul.f32 %v269, %v322
    %v371 = vmul.f32 %v273, %v310
    %v372 = vmul.f32 %v273, %v314
    %v373 = vmul.f32 %v273, %v318
    %v374 = vmul.f32 %v273, %v322
    %v375 = vmul.f32 %v277, %v310
    %v376 = vmul.f32 %v277, %v314
    %v377 = vmul.f32 %v277, %v318
    %v378 = vmul.f32 %v277, %v322
    %v379 = vmul.f32 %v281, %v310
    %v380 = vmul.f32 %v281, %v314
    %v381 = vmul.f32 %v281, %v318
    %v382 = vmul.f32 %v281, %v322
    %v383 = vmul.f32 %v285, %v310
    %v384 = vmul.f32 %v285, %v314
    %v385 = vmul.f32 %v285, %v318
    %v386 = vmul.f32 %v285, %v322
    %v387 = vadd.f32 %v159, %v323
    %v388 = vadd.f32 %v160, %v324
    %v389 = vadd.f32 %v161, %v325
    %v390 = vadd.f32 %v162, %v326
    %v391 = vadd.f32 %v163, %v327
    %v392 = vadd.f32 %v164, %v328
    %v393 = vadd.f32 %v165, %v329
    %v394 = vadd.f32 %v166, %v330
    %v395 = vadd.f32 %v167, %v331
    %v396 = vadd.f32 %v168, %v332
    %v397 = vadd.f32 %v169, %v333
    %v398 = vadd.f32 %v170, %v334
    %v399 = vadd.f32 %v171, %v335
    %v400 = vadd.f32 %v172, %v336
    %v401 = vadd.f32 %v173, %v337
    %v402 = vadd.f32 %v174, %v338
    %v403 = vadd.f32 %v175, %v339
    %v404 = vadd.f32 %v176, %v340
    %v405 = vadd.f32 %v177, %v341
    %v406 = vadd.f32 %v178, %v342
    %v407 = vadd.f32 %v179, %v343
    %v408 = vadd.f32 %v180, %v344
    %v409 = vadd.f32 %v181, %v345
    %v410 = vadd.f32 %v182, %v346
    %v411 = vadd.f32 %v183, %v347
    %v412 = vadd.f32 %v184, %v348
    %v413 = vadd.f32 %v185, %v349
    %v414 = vadd.f32 %v186, %v350
    %v415 = vadd.f32 %v187, %v351
    %v416 = vadd.f32 %v188, %v352
    %v417 = vadd.f32 %v189, %v353
    %v418 = vadd.f32 %v190, %v354
    %v419 = vadd.f32 %v191, %v355
    %v420 = vadd.f32 %v192, %v356
    %v421 = vadd.f32 %v193, %v357
    %v422 = vadd.f32 %v194, %v358
    %v423 = vadd.f32 %v195, %v359
    %v424 = vadd.f32 %v196, %v360
    %v425 = vadd.f32 %v197, %v361
    %v426 = vadd.f32 %v198, %v362
    %v427 = vadd.f32 %v199, %v363
    %v428 = vadd.f32 %v200, %v364
    %v429 = vadd.f32 %v201, %v365
    %v430 = vadd.f32 %v202, %v366
    %v431 = vadd.f32 %v203, %v367
    %v432 = vadd.f32 %v204, %v368
    %v433 = vadd.f32 %v205, %v369
    %v434 = vadd.f32 %v206, %v370
    %v435 = vadd.f32 %v207, %v371
    %v436 = vadd.f32 %v208, %v372
    %v437 = vadd.f32 %v209, %v373
    %v438 = vadd.f32 %v210, %v374
    %v439 = vadd.f32 %v211, %v375
    %v440 = vadd.f32 %v212, %v376
    %v441 = vadd.f32 %v213, %v377
    %v442 = vadd.f32 %v214, %v378
    %v443 = vadd.f32 %v215, %v379
    %v444 = vadd.f32 %v216, %v380
    %v445 = vadd.f32 %v217, %v381
    %v446 = vadd.f32 %v218, %v382
    %v447 = vadd.f32 %v219, %v383
    %v448 = vadd.f32 %v220, %v384
    %v449 = vadd.f32 %v221, %v385
    %v450 = vadd.f32 %v222, %v386
    %451 = vset.pattern.permute.xlu0 2
    %452 = vperm.xlu0 %451, %v25
    %v453 = vpop.permute.xlu0 %452
    %455 = vset.pattern.permute.xlu0 2
    %456 = vperm.xlu0 %455, %v26
    %v457 = vpop.permute.xlu0 %456
    %459 = vset.pattern.permute.xlu0 2
    %460 = vperm.xlu0 %459, %v27
    %v461 = vpop.permute.xlu0 %460
    %463 = vset.pattern.permute.xlu0 2
    %464 = vperm.xlu0 %463, %v28
    %v465 = vpop.permute.xlu0 %464
    %467 = vset.pattern.permute.xlu0 2
    %468 = vperm.xlu0 %467, %v29
    %v469 = vpop.permute.xlu0 %468
    %471 = vset.pattern.permute.xlu0 2
    %472 = vperm.xlu0 %471, %v30
    %v473 = vpop.permute.xlu0 %472
    %475 = vset.pattern.permute.xlu0 2
    %476 = vperm.xlu0 %475, %v31
    %v477 = vpop.permute.xlu0 %476
    %479 = vset.pattern.permute.xlu0 2
    %480 = vperm.xlu0 %479, %v32
    %v481 = vpop.permute.xlu0 %480
    %483 = vset.pattern.permute.xlu0 2
    %484 = vperm.xlu0 %483, %v33
    %v485 = vpop.permute.xlu0 %484
    %487 = vset.pattern.permute.xlu0 2
    %488 = vperm.xlu0 %487, %v34
    %v489 = vpop.permute.xlu0 %488
    %491 = vset.pattern.permute.xlu0 2
    %492 = vperm.xlu0 %491, %v35
    %v493 = vpop.permute.xlu0 %492
    %495 = vset.pattern.permute.xlu0 2
    %496 = vperm.xlu0 %495, %v36
    %v497 = vpop.permute.xlu0 %496
    %499 = vset.pattern.permute.xlu0 2
    %500 = vperm.xlu0 %499, %v37
    %v501 = vpop.permute.xlu0 %500
    %503 = vset.pattern.permute.xlu0 2
    %504 = vperm.xlu0 %503, %v38
    %v505 = vpop.permute.xlu0 %504
    %507 = vset.pattern.permute.xlu0 2
    %508 = vperm.xlu0 %507, %v39
    %v509 = vpop.permute.xlu0 %508
    %511 = vset.pattern.permute.xlu0 2
    %512 = vperm.xlu0 %511, %v40
    %v513 = vpop.permute.xlu0 %512
    %v515 = vlaneseq
    %v516 = vshrl.u32 %v515, 7
    %v517 = vsub.s32 2, %v516
    %v518 = vrot.slane %v23, %v517
    %v519 = vlaneseq
    %v520 = vshrl.u32 %v519, 7
    %v521 = vsub.s32 6, %v520
    %v522 = vrot.slane %v23, %v521
    %v523 = vlaneseq
    %v524 = vshrl.u32 %v523, 7
    %v525 = vsub.s32 2, %v524
    %v526 = vrot.slane %v24, %v525
    %v527 = vlaneseq
    %v528 = vshrl.u32 %v527, 7
    %v529 = vsub.s32 6, %v528
    %v530 = vrot.slane %v24, %v529
    %v535 = vlaneseq
    %v536 = vshrl.u32 %v535, 7
    %v537 = vsub.s32 2, %v536
    %v538 = vrot.slane %v518, %v537
    %v539 = vlaneseq
    %v540 = vshrl.u32 %v539, 7
    %v541 = vsub.s32 2, %v540
    %v542 = vrot.slane %v522, %v541
    %v543 = vlaneseq
    %v544 = vshrl.u32 %v543, 7
    %v545 = vsub.s32 2, %v544
    %v546 = vrot.slane %v526, %v545
    %v547 = vlaneseq
    %v548 = vshrl.u32 %v547, 7
    %v549 = vsub.s32 2, %v548
    %v550 = vrot.slane %v530, %v549
    %v551 = vmul.f32 %v453, %v538
    %v552 = vmul.f32 %v453, %v542
    %v553 = vmul.f32 %v453, %v546
    %v554 = vmul.f32 %v453, %v550
    %v555 = vmul.f32 %v457, %v538
    %v556 = vmul.f32 %v457, %v542
    %v557 = vmul.f32 %v457, %v546
    %v558 = vmul.f32 %v457, %v550
    %v559 = vmul.f32 %v461, %v538
    %v560 = vmul.f32 %v461, %v542
    %v561 = vmul.f32 %v461, %v546
    %v562 = vmul.f32 %v461, %v550
    %v563 = vmul.f32 %v465, %v538
    %v564 = vmul.f32 %v465, %v542
    %v565 = vmul.f32 %v465, %v546
    %v566 = vmul.f32 %v465, %v550
    %v567 = vmul.f32 %v469, %v538
    %v568 = vmul.f32 %v469, %v542
    %v569 = vmul.f32 %v469, %v546
    %v570 = vmul.f32 %v469, %v550
    %v571 = vmul.f32 %v473, %v538
    %v572 = vmul.f32 %v473, %v542
    %v573 = vmul.f32 %v473, %v546
    %v574 = vmul.f32 %v473, %v550
    %v575 = vmul.f32 %v477, %v538
    %v576 = vmul.f32 %v477, %v542
    %v577 = vmul.f32 %v477, %v546
    %v578 = vmul.f32 %v477, %v550
    %v579 = vmul.f32 %v481, %v538
    %v580 = vmul.f32 %v481, %v542
    %v581 = vmul.f32 %v481, %v546
    %v582 = vmul.f32 %v481, %v550
    %v583 = vmul.f32 %v485, %v538
    %v584 = vmul.f32 %v485, %v542
    %v585 = vmul.f32 %v485, %v546
    %v586 = vmul.f32 %v485, %v550
    %v587 = vmul.f32 %v489, %v538
    %v588 = vmul.f32 %v489, %v542
    %v589 = vmul.f32 %v489, %v546
    %v590 = vmul.f32 %v489, %v550
    %v591 = vmul.f32 %v493, %v538
    %v592 = vmul.f32 %v493, %v542
    %v593 = vmul.f32 %v493, %v546
    %v594 = vmul.f32 %v493, %v550
    %v595 = vmul.f32 %v497, %v538
    %v596 = vmul.f32 %v497, %v542
    %v597 = vmul.f32 %v497, %v546
    %v598 = vmul.f32 %v497, %v550
    %v599 = vmul.f32 %v501, %v538
    %v600 = vmul.f32 %v501, %v542
    %v601 = vmul.f32 %v501, %v546
    %v602 = vmul.f32 %v501, %v550
    %v603 = vmul.f32 %v505, %v538
    %v604 = vmul.f32 %v505, %v542
    %v605 = vmul.f32 %v505, %v546
    %v606 = vmul.f32 %v505, %v550
    %v607 = vmul.f32 %v509, %v538
    %v608 = vmul.f32 %v509, %v542
    %v609 = vmul.f32 %v509, %v546
    %v610 = vmul.f32 %v509, %v550
    %v611 = vmul.f32 %v513, %v538
    %v612 = vmul.f32 %v513, %v542
    %v613 = vmul.f32 %v513, %v546
    %v614 = vmul.f32 %v513, %v550
    %v615 = vadd.f32 %v387, %v551
    %v616 = vadd.f32 %v388, %v552
    %v617 = vadd.f32 %v389, %v553
    %v618 = vadd.f32 %v390, %v554
    %v619 = vadd.f32 %v391, %v555
    %v620 = vadd.f32 %v392, %v556
    %v621 = vadd.f32 %v393, %v557
    %v622 = vadd.f32 %v394, %v558
    %v623 = vadd.f32 %v395, %v559
    %v624 = vadd.f32 %v396, %v560
    %v625 = vadd.f32 %v397, %v561
    %v626 = vadd.f32 %v398, %v562
    %v627 = vadd.f32 %v399, %v563
    %v628 = vadd.f32 %v400, %v564
    %v629 = vadd.f32 %v401, %v565
    %v630 = vadd.f32 %v402, %v566
    %v631 = vadd.f32 %v403, %v567
    %v632 = vadd.f32 %v404, %v568
    %v633 = vadd.f32 %v405, %v569
    %v634 = vadd.f32 %v406, %v570
    %v635 = vadd.f32 %v407, %v571
    %v636 = vadd.f32 %v408, %v572
    %v637 = vadd.f32 %v409, %v573
    %v638 = vadd.f32 %v410, %v574
    %v639 = vadd.f32 %v411, %v575
    %v640 = vadd.f32 %v412, %v576
    %v641 = vadd.f32 %v413, %v577
    %v642 = vadd.f32 %v414, %v578
    %v643 = vadd.f32 %v415, %v579
    %v644 = vadd.f32 %v416, %v580
    %v645 = vadd.f32 %v417, %v581
    %v646 = vadd.f32 %v418, %v582
    %v647 = vadd.f32 %v419, %v583
    %v648 = vadd.f32 %v420, %v584
    %v649 = vadd.f32 %v421, %v585
    %v650 = vadd.f32 %v422, %v586
    %v651 = vadd.f32 %v423, %v587
    %v652 = vadd.f32 %v424, %v588
    %v653 = vadd.f32 %v425, %v589
    %v654 = vadd.f32 %v426, %v590
    %v655 = vadd.f32 %v427, %v591
    %v656 = vadd.f32 %v428, %v592
    %v657 = vadd.f32 %v429, %v593
    %v658 = vadd.f32 %v430, %v594
    %v659 = vadd.f32 %v431, %v595
    %v660 = vadd.f32 %v432, %v596
    %v661 = vadd.f32 %v433, %v597
    %v662 = vadd.f32 %v434, %v598
    %v663 = vadd.f32 %v435, %v599
    %v664 = vadd.f32 %v436, %v600
    %v665 = vadd.f32 %v437, %v601
    %v666 = vadd.f32 %v438, %v602
    %v667 = vadd.f32 %v439, %v603
    %v668 = vadd.f32 %v440, %v604
    %v669 = vadd.f32 %v441, %v605
    %v670 = vadd.f32 %v442, %v606
    %v671 = vadd.f32 %v443, %v607
    %v672 = vadd.f32 %v444, %v608
    %v673 = vadd.f32 %v445, %v609
    %v674 = vadd.f32 %v446, %v610
    %v675 = vadd.f32 %v447, %v611
    %v676 = vadd.f32 %v448, %v612
    %v677 = vadd.f32 %v449, %v613
    %v678 = vadd.f32 %v450, %v614
    %679 = vset.pattern.permute.xlu0 3
    %680 = vperm.xlu0 %679, %v25
    %v681 = vpop.permute.xlu0 %680
    %683 = vset.pattern.permute.xlu0 3
    %684 = vperm.xlu0 %683, %v26
    %v685 = vpop.permute.xlu0 %684
    %687 = vset.pattern.permute.xlu0 3
    %688 = vperm.xlu0 %687, %v27
    %v689 = vpop.permute.xlu0 %688
    %691 = vset.pattern.permute.xlu0 3
    %692 = vperm.xlu0 %691, %v28
    %v693 = vpop.permute.xlu0 %692
    %695 = vset.pattern.permute.xlu0 3
    %696 = vperm.xlu0 %695, %v29
    %v697 = vpop.permute.xlu0 %696
    %699 = vset.pattern.permute.xlu0 3
    %700 = vperm.xlu0 %699, %v30
    %v701 = vpop.permute.xlu0 %700
    %703 = vset.pattern.permute.xlu0 3
    %704 = vperm.xlu0 %703, %v31
    %v705 = vpop.permute.xlu0 %704
    %707 = vset.pattern.permute.xlu0 3
    %708 = vperm.xlu0 %707, %v32
    %v709 = vpop.permute.xlu0 %708
    %711 = vset.pattern.permute.xlu0 3
    %712 = vperm.xlu0 %711, %v33
    %v713 = vpop.permute.xlu0 %712
    %715 = vset.pattern.permute.xlu0 3
    %716 = vperm.xlu0 %715, %v34
    %v717 = vpop.permute.xlu0 %716
    %719 = vset.pattern.permute.xlu0 3
    %720 = vperm.xlu0 %719, %v35
    %v721 = vpop.permute.xlu0 %720
    %723 = vset.pattern.permute.xlu0 3
    %724 = vperm.xlu0 %723, %v36
    %v725 = vpop.permute.xlu0 %724
    %727 = vset.pattern.permute.xlu0 3
    %728 = vperm.xlu0 %727, %v37
    %v729 = vpop.permute.xlu0 %728
    %731 = vset.pattern.permute.xlu0 3
    %732 = vperm.xlu0 %731, %v38
    %v733 = vpop.permute.xlu0 %732
    %735 = vset.pattern.permute.xlu0 3
    %736 = vperm.xlu0 %735, %v39
    %v737 = vpop.permute.xlu0 %736
    %739 = vset.pattern.permute.xlu0 3
    %740 = vperm.xlu0 %739, %v40
    %v741 = vpop.permute.xlu0 %740
    %v743 = vlaneseq
    %v744 = vshrl.u32 %v743, 7
    %v745 = vsub.s32 3, %v744
    %v746 = vrot.slane %v23, %v745
    %v747 = vlaneseq
    %v748 = vshrl.u32 %v747, 7
    %v749 = vsub.s32 7, %v748
    %v750 = vrot.slane %v23, %v749
    %v751 = vlaneseq
    %v752 = vshrl.u32 %v751, 7
    %v753 = vsub.s32 3, %v752
    %v754 = vrot.slane %v24, %v753
    %v755 = vlaneseq
    %v756 = vshrl.u32 %v755, 7
    %v757 = vsub.s32 7, %v756
    %v758 = vrot.slane %v24, %v757
    %v763 = vlaneseq
    %v764 = vshrl.u32 %v763, 7
    %v765 = vsub.s32 3, %v764
    %v766 = vrot.slane %v746, %v765
    %v767 = vlaneseq
    %v768 = vshrl.u32 %v767, 7
    %v769 = vsub.s32 3, %v768
    %v770 = vrot.slane %v750, %v769
    %v771 = vlaneseq
    %v772 = vshrl.u32 %v771, 7
    %v773 = vsub.s32 3, %v772
    %v774 = vrot.slane %v754, %v773
    %v775 = vlaneseq
    %v776 = vshrl.u32 %v775, 7
    %v777 = vsub.s32 3, %v776
    %v778 = vrot.slane %v758, %v777
    %v779 = vmul.f32 %v681, %v766
    %v780 = vmul.f32 %v681, %v770
    %v781 = vmul.f32 %v681, %v774
    %v782 = vmul.f32 %v681, %v778
    %v783 = vmul.f32 %v685, %v766
    %v784 = vmul.f32 %v685, %v770
    %v785 = vmul.f32 %v685, %v774
    %v786 = vmul.f32 %v685, %v778
    %v787 = vmul.f32 %v689, %v766
    %v788 = vmul.f32 %v689, %v770
    %v789 = vmul.f32 %v689, %v774
    %v790 = vmul.f32 %v689, %v778
    %v791 = vmul.f32 %v693, %v766
    %v792 = vmul.f32 %v693, %v770
    %v793 = vmul.f32 %v693, %v774
    %v794 = vmul.f32 %v693, %v778
    %v795 = vmul.f32 %v697, %v766
    %v796 = vmul.f32 %v697, %v770
    %v797 = vmul.f32 %v697, %v774
    %v798 = vmul.f32 %v697, %v778
    %v799 = vmul.f32 %v701, %v766
    %v800 = vmul.f32 %v701, %v770
    %v801 = vmul.f32 %v701, %v774
    %v802 = vmul.f32 %v701, %v778
    %v803 = vmul.f32 %v705, %v766
    %v804 = vmul.f32 %v705, %v770
    %v805 = vmul.f32 %v705, %v774
    %v806 = vmul.f32 %v705, %v778
    %v807 = vmul.f32 %v709, %v766
    %v808 = vmul.f32 %v709, %v770
    %v809 = vmul.f32 %v709, %v774
    %v810 = vmul.f32 %v709, %v778
    %v811 = vmul.f32 %v713, %v766
    %v812 = vmul.f32 %v713, %v770
    %v813 = vmul.f32 %v713, %v774
    %v814 = vmul.f32 %v713, %v778
    %v815 = vmul.f32 %v717, %v766
    %v816 = vmul.f32 %v717, %v770
    %v817 = vmul.f32 %v717, %v774
    %v818 = vmul.f32 %v717, %v778
    %v819 = vmul.f32 %v721, %v766
    %v820 = vmul.f32 %v721, %v770
    %v821 = vmul.f32 %v721, %v774
    %v822 = vmul.f32 %v721, %v778
    %v823 = vmul.f32 %v725, %v766
    %v824 = vmul.f32 %v725, %v770
    %v825 = vmul.f32 %v725, %v774
    %v826 = vmul.f32 %v725, %v778
    %v827 = vmul.f32 %v729, %v766
    %v828 = vmul.f32 %v729, %v770
    %v829 = vmul.f32 %v729, %v774
    %v830 = vmul.f32 %v729, %v778
    %v831 = vmul.f32 %v733, %v766
    %v832 = vmul.f32 %v733, %v770
    %v833 = vmul.f32 %v733, %v774
    %v834 = vmul.f32 %v733, %v778
    %v835 = vmul.f32 %v737, %v766
    %v836 = vmul.f32 %v737, %v770
    %v837 = vmul.f32 %v737, %v774
    %v838 = vmul.f32 %v737, %v778
    %v839 = vmul.f32 %v741, %v766
    %v840 = vmul.f32 %v741, %v770
    %v841 = vmul.f32 %v741, %v774
    %v842 = vmul.f32 %v741, %v778
    %v843 = vadd.f32 %v615, %v779
    %v844 = vadd.f32 %v616, %v780
    %v845 = vadd.f32 %v617, %v781
    %v846 = vadd.f32 %v618, %v782
    %v847 = vadd.f32 %v619, %v783
    %v848 = vadd.f32 %v620, %v784
    %v849 = vadd.f32 %v621, %v785
    %v850 = vadd.f32 %v622, %v786
    %v851 = vadd.f32 %v623, %v787
    %v852 = vadd.f32 %v624, %v788
    %v853 = vadd.f32 %v625, %v789
    %v854 = vadd.f32 %v626, %v790
    %v855 = vadd.f32 %v627, %v791
    %v856 = vadd.f32 %v628, %v792
    %v857 = vadd.f32 %v629, %v793
    %v858 = vadd.f32 %v630, %v794
    %v859 = vadd.f32 %v631, %v795
    %v860 = vadd.f32 %v632, %v796
    %v861 = vadd.f32 %v633, %v797
    %v862 = vadd.f32 %v634, %v798
    %v863 = vadd.f32 %v635, %v799
    %v864 = vadd.f32 %v636, %v800
    %v865 = vadd.f32 %v637, %v801
    %v866 = vadd.f32 %v638, %v802
    %v867 = vadd.f32 %v639, %v803
    %v868 = vadd.f32 %v640, %v804
    %v869 = vadd.f32 %v641, %v805
    %v870 = vadd.f32 %v642, %v806
    %v871 = vadd.f32 %v643, %v807
    %v872 = vadd.f32 %v644, %v808
    %v873 = vadd.f32 %v645, %v809
    %v874 = vadd.f32 %v646, %v810
    %v875 = vadd.f32 %v647, %v811
    %v876 = vadd.f32 %v648, %v812
    %v877 = vadd.f32 %v649, %v813
    %v878 = vadd.f32 %v650, %v814
    %v879 = vadd.f32 %v651, %v815
    %v880 = vadd.f32 %v652, %v816
    %v881 = vadd.f32 %v653, %v817
    %v882 = vadd.f32 %v654, %v818
    %v883 = vadd.f32 %v655, %v819
    %v884 = vadd.f32 %v656, %v820
    %v885 = vadd.f32 %v657, %v821
    %v886 = vadd.f32 %v658, %v822
    %v887 = vadd.f32 %v659, %v823
    %v888 = vadd.f32 %v660, %v824
    %v889 = vadd.f32 %v661, %v825
    %v890 = vadd.f32 %v662, %v826
    %v891 = vadd.f32 %v663, %v827
    %v892 = vadd.f32 %v664, %v828
    %v893 = vadd.f32 %v665, %v829
    %v894 = vadd.f32 %v666, %v830
    %v895 = vadd.f32 %v667, %v831
    %v896 = vadd.f32 %v668, %v832
    %v897 = vadd.f32 %v669, %v833
    %v898 = vadd.f32 %v670, %v834
    %v899 = vadd.f32 %v671, %v835
    %v900 = vadd.f32 %v672, %v836
    %v901 = vadd.f32 %v673, %v837
    %v902 = vadd.f32 %v674, %v838
    %v903 = vadd.f32 %v675, %v839
    %v904 = vadd.f32 %v676, %v840
    %v905 = vadd.f32 %v677, %v841
    %v906 = vadd.f32 %v678, %v842
    %v907 = vld [vmem:[%s2] sm:$0xff]
    %v908 = vld [vmem:[%s2 + $0x8] sm:$0xff]
    %v909 = vld [vmem:[%s2 + $0x10] sm:$0xff]
    %v910 = vld [vmem:[%s2 + $0x18] sm:$0xff]
    %v911 = vld [vmem:[%s2 + $0x20] sm:$0xff]
    %v912 = vld [vmem:[%s2 + $0x28] sm:$0xff]
    %v913 = vld [vmem:[%s2 + $0x30] sm:$0xff]
    %v914 = vld [vmem:[%s2 + $0x38] sm:$0xff]
    %v915 = vld [vmem:[%s2 + $0x40] sm:$0xff]
    %v916 = vld [vmem:[%s2 + $0x48] sm:$0xff]
    %v917 = vld [vmem:[%s2 + $0x50] sm:$0xff]
    %v918 = vld [vmem:[%s2 + $0x58] sm:$0xff]
    %v919 = vld [vmem:[%s2 + $0x60] sm:$0xff]
    %v920 = vld [vmem:[%s2 + $0x68] sm:$0xff]
    %v921 = vld [vmem:[%s2 + $0x70] sm:$0xff]
    %v922 = vld [vmem:[%s2 + $0x78] sm:$0xff]
    %924 = vset.pattern.permute.xlu0 0
    %925 = vperm.xlu0 %924, %v907
    %v926 = vpop.permute.xlu0 %925
    %929 = vset.pattern.permute.xlu0 0
    %930 = vperm.xlu0 %929, %v908
    %v931 = vpop.permute.xlu0 %930
    %934 = vset.pattern.permute.xlu0 0
    %935 = vperm.xlu0 %934, %v909
    %v936 = vpop.permute.xlu0 %935
    %939 = vset.pattern.permute.xlu0 0
    %940 = vperm.xlu0 %939, %v910
    %v941 = vpop.permute.xlu0 %940
    %944 = vset.pattern.permute.xlu0 0
    %945 = vperm.xlu0 %944, %v911
    %v946 = vpop.permute.xlu0 %945
    %949 = vset.pattern.permute.xlu0 0
    %950 = vperm.xlu0 %949, %v912
    %v951 = vpop.permute.xlu0 %950
    %954 = vset.pattern.permute.xlu0 0
    %955 = vperm.xlu0 %954, %v913
    %v956 = vpop.permute.xlu0 %955
    %959 = vset.pattern.permute.xlu0 0
    %960 = vperm.xlu0 %959, %v914
    %v961 = vpop.permute.xlu0 %960
    %964 = vset.pattern.permute.xlu0 0
    %965 = vperm.xlu0 %964, %v915
    %v966 = vpop.permute.xlu0 %965
    %969 = vset.pattern.permute.xlu0 0
    %970 = vperm.xlu0 %969, %v916
    %v971 = vpop.permute.xlu0 %970
    %974 = vset.pattern.permute.xlu0 0
    %975 = vperm.xlu0 %974, %v917
    %v976 = vpop.permute.xlu0 %975
    %979 = vset.pattern.permute.xlu0 0
    %980 = vperm.xlu0 %979, %v918
    %v981 = vpop.permute.xlu0 %980
    %984 = vset.pattern.permute.xlu0 0
    %985 = vperm.xlu0 %984, %v919
    %v986 = vpop.permute.xlu0 %985
    %989 = vset.pattern.permute.xlu0 0
    %990 = vperm.xlu0 %989, %v920
    %v991 = vpop.permute.xlu0 %990
    %994 = vset.pattern.permute.xlu0 0
    %995 = vperm.xlu0 %994, %v921
    %v996 = vpop.permute.xlu0 %995
    %999 = vset.pattern.permute.xlu0 0
    %1000 = vperm.xlu0 %999, %v922
    %v1001 = vpop.permute.xlu0 %1000
    %v1003 = vadd.f32 %v843, %v926
    %v1004 = vadd.f32 %v844, %v926
    %v1005 = vadd.f32 %v845, %v926
    %v1006 = vadd.f32 %v846, %v926
    %v1007 = vadd.f32 %v847, %v931
    %v1008 = vadd.f32 %v848, %v931
    %v1009 = vadd.f32 %v849, %v931
    %v1010 = vadd.f32 %v850, %v931
    %v1011 = vadd.f32 %v851, %v936
    %v1012 = vadd.f32 %v852, %v936
    %v1013 = vadd.f32 %v853, %v936
    %v1014 = vadd.f32 %v854, %v936
    %v1015 = vadd.f32 %v855, %v941
    %v1016 = vadd.f32 %v856, %v941
    %v1017 = vadd.f32 %v857, %v941
    %v1018 = vadd.f32 %v858, %v941
    %v1019 = vadd.f32 %v859, %v946
    %v1020 = vadd.f32 %v860, %v946
    %v1021 = vadd.f32 %v861, %v946
    %v1022 = vadd.f32 %v862, %v946
    %v1023 = vadd.f32 %v863, %v951
    %v1024 = vadd.f32 %v864, %v951
    %v1025 = vadd.f32 %v865, %v951
    %v1026 = vadd.f32 %v866, %v951
    %v1027 = vadd.f32 %v867, %v956
    %v1028 = vadd.f32 %v868, %v956
    %v1029 = vadd.f32 %v869, %v956
    %v1030 = vadd.f32 %v870, %v956
    %v1031 = vadd.f32 %v871, %v961
    %v1032 = vadd.f32 %v872, %v961
    %v1033 = vadd.f32 %v873, %v961
    %v1034 = vadd.f32 %v874, %v961
    %v1035 = vadd.f32 %v875, %v966
    %v1036 = vadd.f32 %v876, %v966
    %v1037 = vadd.f32 %v877, %v966
    %v1038 = vadd.f32 %v878, %v966
    %v1039 = vadd.f32 %v879, %v971
    %v1040 = vadd.f32 %v880, %v971
    %v1041 = vadd.f32 %v881, %v971
    %v1042 = vadd.f32 %v882, %v971
    %v1043 = vadd.f32 %v883, %v976
    %v1044 = vadd.f32 %v884, %v976
    %v1045 = vadd.f32 %v885, %v976
    %v1046 = vadd.f32 %v886, %v976
    %v1047 = vadd.f32 %v887, %v981
    %v1048 = vadd.f32 %v888, %v981
    %v1049 = vadd.f32 %v889, %v981
    %v1050 = vadd.f32 %v890, %v981
    %v1051 = vadd.f32 %v891, %v986
    %v1052 = vadd.f32 %v892, %v986
    %v1053 = vadd.f32 %v893, %v986
    %v1054 = vadd.f32 %v894, %v986
    %v1055 = vadd.f32 %v895, %v991
    %v1056 = vadd.f32 %v896, %v991
    %v1057 = vadd.f32 %v897, %v991
    %v1058 = vadd.f32 %v898, %v991
    %v1059 = vadd.f32 %v899, %v996
    %v1060 = vadd.f32 %v900, %v996
    %v1061 = vadd.f32 %v901, %v996
    %v1062 = vadd.f32 %v902, %v996
    %v1063 = vadd.f32 %v903, %v1001
    %v1064 = vadd.f32 %v904, %v1001
    %v1065 = vadd.f32 %v905, %v1001
    %v1066 = vadd.f32 %v906, %v1001
    %v1067 = vmax.f32 %v1003, 0.0
    %v1068 = vmax.f32 %v1004, 0.0
    %v1069 = vmax.f32 %v1005, 0.0
    %v1070 = vmax.f32 %v1006, 0.0
    %v1071 = vmax.f32 %v1007, 0.0
    %v1072 = vmax.f32 %v1008, 0.0
    %v1073 = vmax.f32 %v1009, 0.0
    %v1074 = vmax.f32 %v1010, 0.0
    %v1075 = vmax.f32 %v1011, 0.0
    %v1076 = vmax.f32 %v1012, 0.0
    %v1077 = vmax.f32 %v1013, 0.0
    %v1078 = vmax.f32 %v1014, 0.0
    %v1079 = vmax.f32 %v1015, 0.0
    %v1080 = vmax.f32 %v1016, 0.0
    %v1081 = vmax.f32 %v1017, 0.0
    %v1082 = vmax.f32 %v1018, 0.0
    %v1083 = vmax.f32 %v1019, 0.0
    %v1084 = vmax.f32 %v1020, 0.0
    %v1085 = vmax.f32 %v1021, 0.0
    %v1086 = vmax.f32 %v1022, 0.0
    %v1087 = vmax.f32 %v1023, 0.0
    %v1088 = vmax.f32 %v1024, 0.0
    %v1089 = vmax.f32 %v1025, 0.0
    %v1090 = vmax.f32 %v1026, 0.0
    %v1091 = vmax.f32 %v1027, 0.0
    %v1092 = vmax.f32 %v1028, 0.0
    %v1093 = vmax.f32 %v1029, 0.0
    %v1094 = vmax.f32 %v1030, 0.0
    %v1095 = vmax.f32 %v1031, 0.0
    %v1096 = vmax.f32 %v1032, 0.0
    %v1097 = vmax.f32 %v1033, 0.0
    %v1098 = vmax.f32 %v1034, 0.0
    %v1099 = vmax.f32 %v1035, 0.0
    %v1100 = vmax.f32 %v1036, 0.0
    %v1101 = vmax.f32 %v1037, 0.0
    %v1102 = vmax.f32 %v1038, 0.0
    %v1103 = vmax.f32 %v1039, 0.0
    %v1104 = vmax.f32 %v1040, 0.0
    %v1105 = vmax.f32 %v1041, 0.0
    %v1106 = vmax.f32 %v1042, 0.0
    %v1107 = vmax.f32 %v1043, 0.0
    %v1108 = vmax.f32 %v1044, 0.0
    %v1109 = vmax.f32 %v1045, 0.0
    %v1110 = vmax.f32 %v1046, 0.0
    %v1111 = vmax.f32 %v1047, 0.0
    %v1112 = vmax.f32 %v1048, 0.0
    %v1113 = vmax.f32 %v1049, 0.0
    %v1114 = vmax.f32 %v1050, 0.0
    %v1115 = vmax.f32 %v1051, 0.0
    %v1116 = vmax.f32 %v1052, 0.0
    %v1117 = vmax.f32 %v1053, 0.0
    %v1118 = vmax.f32 %v1054, 0.0
    %v1119 = vmax.f32 %v1055, 0.0
    %v1120 = vmax.f32 %v1056, 0.0
    %v1121 = vmax.f32 %v1057, 0.0
    %v1122 = vmax.f32 %v1058, 0.0
    %v1123 = vmax.f32 %v1059, 0.0
    %v1124 = vmax.f32 %v1060, 0.0
    %v1125 = vmax.f32 %v1061, 0.0
    %v1126 = vmax.f32 %v1062, 0.0
    %v1127 = vmax.f32 %v1063, 0.0
    %v1128 = vmax.f32 %v1064, 0.0
    %v1129 = vmax.f32 %v1065, 0.0
    %v1130 = vmax.f32 %v1066, 0.0
    %v1131 = vld [vmem:[%s3] sm:$0x1]
    %v1132 = vld [vmem:[#allocation2] sm:$0x1]
    %1134 = vset.pattern.permute.xlu0 0
    %1135 = vperm.xlu0 %1134, %v1132
    %v1136 = vpop.permute.xlu0 %1135
    %v1138 = vlaneseq
    %v1139 = vshrl.u32 %v1138, 7
    %v1140 = vsub.s32 0, %v1139
    %v1141 = vrot.slane %v1136, %v1140
    %1142 = vmatprep.subr.mxu0 %v1068
    %1143 = vmatpush1.msra.mxu0 %v1067
    %1144 = vmatprep.subr.mxu0 %v1072
    %1145 = vmatpush1.msra.mxu0 %v1071
    %1146 = vmatprep.subr.mxu0 %v1076
    %1147 = vmatpush1.msra.mxu0 %v1075
    %1148 = vmatprep.subr.mxu0 %v1080
    %1149 = vmatpush1.msra.mxu0 %v1079
    %1150 = vmatprep.subr.mxu0 %v1084
    %1151 = vmatpush1.msra.mxu0 %v1083
    %1152 = vmatprep.subr.mxu0 %v1088
    %1153 = vmatpush1.msra.mxu0 %v1087
    %1154 = vmatprep.subr.mxu0 %v1092
    %1155 = vmatpush1.msra.mxu0 %v1091
    %1156 = vmatprep.subr.mxu0 %v1096
    %1157 = vmatpush1.msra.mxu0 %v1095
    %1158 = vmatprep.subr.mxu0 %v1100
    %1159 = vmatpush1.msra.mxu0 %v1099
    %1160 = vmatprep.subr.mxu0 %v1104
    %1161 = vmatpush1.msra.mxu0 %v1103
    %1162 = vmatprep.subr.mxu0 %v1108
    %1163 = vmatpush1.msra.mxu0 %v1107
    %1164 = vmatprep.subr.mxu0 %v1112
    %1165 = vmatpush1.msra.mxu0 %v1111
    %1166 = vmatprep.subr.mxu0 %v1116
    %1167 = vmatpush1.msra.mxu0 %v1115
    %1168 = vmatprep.subr.mxu0 %v1120
    %1169 = vmatpush1.msra.mxu0 %v1119
    %1170 = vmatprep.subr.mxu0 %v1124
    %1171 = vmatpush1.msra.mxu0 %v1123
    %1172 = vmatprep.subr.mxu0 %v1128
    %1173 = vmatpush1.msra.mxu0 %v1127
    %1174 = vmatprep.subr.mxu0 0.0
    %1175 = vmatpush1.msra.mxu0 0.0
    %1176 = vmatprep.subr.mxu0 0.0
    %1177 = vmatpush1.msra.mxu0 0.0
    %1178 = vmatprep.subr.mxu0 0.0
    %1179 = vmatpush1.msra.mxu0 0.0
    %1180 = vmatprep.subr.mxu0 0.0
    %1181 = vmatpush1.msra.mxu0 0.0
    %1182 = vmatprep.subr.mxu0 0.0
    %1183 = vmatpush1.msra.mxu0 0.0
    %1184 = vmatprep.subr.mxu0 0.0
    %1185 = vmatpush1.msra.mxu0 0.0
    %1186 = vmatprep.subr.mxu0 0.0
    %1187 = vmatpush1.msra.mxu0 0.0
    %1188 = vmatprep.subr.mxu0 0.0
    %1189 = vmatpush1.msra.mxu0 0.0
    %1190 = vmatprep.subr.mxu0 0.0
    %1191 = vmatpush1.msra.mxu0 0.0
    %1192 = vmatprep.subr.mxu0 0.0
    %1193 = vmatpush1.msra.mxu0 0.0
    %1194 = vmatprep.subr.mxu0 0.0
    %1195 = vmatpush1.msra.mxu0 0.0
    %1196 = vmatprep.subr.mxu0 0.0
    %1197 = vmatpush1.msra.mxu0 0.0
    %1198 = vmatprep.subr.mxu0 0.0
    %1199 = vmatpush1.msra.mxu0 0.0
    %1200 = vmatprep.subr.mxu0 0.0
    %1201 = vmatpush1.msra.mxu0 0.0
    %1202 = vmatprep.subr.mxu0 0.0
    %1203 = vmatpush1.msra.mxu0 0.0
    %1204 = vmatprep.subr.mxu0 0.0
    %1205 = vmatpush1.msra.mxu0 0.0
    %1206 = vmatprep.mubr.f32.mxu0 0.0
    %1207 = vmatmul.mubr.f32.gmra.mrb[0].mxu0 %v1131
    %v1208 = vpop.f32.mrb[0].mxu0
    %v1209 = vadd.f32 %v1141, %v1208
    %v1210 = vpop.f32.mrb[0].mxu0
    %v1211 = vadd.f32 %v1141, %v1210
    %1212 = vdwg.mxu0
    %1213 = vmatprep.subr.mxu0 %v1070
    %1214 = vmatpush1.msra.mxu0 %v1069
    %1215 = vmatprep.subr.mxu0 %v1074
    %1216 = vmatpush1.msra.mxu0 %v1073
    %1217 = vmatprep.subr.mxu0 %v1078
    %1218 = vmatpush1.msra.mxu0 %v1077
    %1219 = vmatprep.subr.mxu0 %v1082
    %1220 = vmatpush1.msra.mxu0 %v1081
    %1221 = vmatprep.subr.mxu0 %v1086
    %1222 = vmatpush1.msra.mxu0 %v1085
    %1223 = vmatprep.subr.mxu0 %v1090
    %1224 = vmatpush1.msra.mxu0 %v1089
    %1225 = vmatprep.subr.mxu0 %v1094
    %1226 = vmatpush1.msra.mxu0 %v1093
    %1227 = vmatprep.subr.mxu0 %v1098
    %1228 = vmatpush1.msra.mxu0 %v1097
    %1229 = vmatprep.subr.mxu0 %v1102
    %1230 = vmatpush1.msra.mxu0 %v1101
    %1231 = vmatprep.subr.mxu0 %v1106
    %1232 = vmatpush1.msra.mxu0 %v1105
    %1233 = vmatprep.subr.mxu0 %v1110
    %1234 = vmatpush1.msra.mxu0 %v1109
    %1235 = vmatprep.subr.mxu0 %v1114
    %1236 = vmatpush1.msra.mxu0 %v1113
    %1237 = vmatprep.subr.mxu0 %v1118
    %1238 = vmatpush1.msra.mxu0 %v1117
    %1239 = vmatprep.subr.mxu0 %v1122
    %1240 = vmatpush1.msra.mxu0 %v1121
    %1241 = vmatprep.subr.mxu0 %v1126
    %1242 = vmatpush1.msra.mxu0 %v1125
    %1243 = vmatprep.subr.mxu0 %v1130
    %1244 = vmatpush1.msra.mxu0 %v1129
    %1245 = vmatprep.subr.mxu0 0.0
    %1246 = vmatpush1.msra.mxu0 0.0
    %1247 = vmatprep.subr.mxu0 0.0
    %1248 = vmatpush1.msra.mxu0 0.0
    %1249 = vmatprep.subr.mxu0 0.0
    %1250 = vmatpush1.msra.mxu0 0.0
    %1251 = vmatprep.subr.mxu0 0.0
    %1252 = vmatpush1.msra.mxu0 0.0
    %1253 = vmatprep.subr.mxu0 0.0
    %1254 = vmatpush1.msra.mxu0 0.0
    %1255 = vmatprep.subr.mxu0 0.0
    %1256 = vmatpush1.msra.mxu0 0.0
    %1257 = vmatprep.subr.mxu0 0.0
    %1258 = vmatpush1.msra.mxu0 0.0
    %1259 = vmatprep.subr.mxu0 0.0
    %1260 = vmatpush1.msra.mxu0 0.0
    %1261 = vmatprep.subr.mxu0 0.0
    %1262 = vmatpush1.msra.mxu0 0.0
    %1263 = vmatprep.subr.mxu0 0.0
    %1264 = vmatpush1.msra.mxu0 0.0
    %1265 = vmatprep.subr.mxu0 0.0
    %1266 = vmatpush1.msra.mxu0 0.0
    %1267 = vmatprep.subr.mxu0 0.0
    %1268 = vmatpush1.msra.mxu0 0.0
    %1269 = vmatprep.subr.mxu0 0.0
    %1270 = vmatpush1.msra.mxu0 0.0
    %1271 = vmatprep.subr.mxu0 0.0
    %1272 = vmatpush1.msra.mxu0 0.0
    %1273 = vmatprep.subr.mxu0 0.0
    %1274 = vmatpush1.msra.mxu0 0.0
    %1275 = vmatprep.subr.mxu0 0.0
    %1276 = vmatpush1.msra.mxu0 0.0
    %1277 = vmatprep.mubr.f32.mxu0 0.0
    %1278 = vmatmul.mubr.f32.gmra.mrb[0].mxu0 %v1131
    %v1279 = vpop.f32.mrb[0].mxu0
    %v1280 = vadd.f32 %v1141, %v1279
    %v1281 = vpop.f32.mrb[0].mxu0
    %v1282 = vadd.f32 %v1141, %v1281
    %1283 = vdwg.mxu0
    %v1284 = vsub.f32 0.0, %v1209
    %v1285 = vsub.f32 0.0, %v1211
    %v1286 = vsub.f32 0.0, %v1280
    %v1287 = vsub.f32 0.0, %v1282
    %v1288 = vmul.f32 %v1284, 1.442695
    %v1289 = vpow.pop %v1288
    %v1290 = vmul.f32 %v1285, 1.442695
    %v1291 = vpow.pop %v1290
    %v1292 = vmul.f32 %v1286, 1.442695
    %v1293 = vpow.pop %v1292
    %v1294 = vmul.f32 %v1287, 1.442695
    %v1295 = vpow.pop %v1294
    %v1296 = vadd.f32 %v1289, 1.0
    %v1297 = vadd.f32 %v1291, 1.0
    %v1298 = vadd.f32 %v1293, 1.0
    %v1299 = vadd.f32 %v1295, 1.0
    %v1300 = vrcp.pop %v1296
    %v1301 = vmul.f32 1.0, %v1300
    %v1302 = vrcp.pop %v1297
    %v1303 = vmul.f32 1.0, %v1302
    %v1304 = vrcp.pop %v1298
    %v1305 = vmul.f32 1.0, %v1304
    %v1306 = vrcp.pop %v1299
    %v1307 = vmul.f32 1.0, %v1306
    %v1312 = vcombine.low %v1301, %v1303
    %v1313 = vcombine.low %v1305, %v1307
    %v1315 = vunpack.c.l.s4 1966171168
    %v1316 = vunpack.c.0.s8 %v1315
    %v1317 = vlaneseq
    %v1318 = vshrl.u32 %v1317, 7
    %v1319 = vsub.s32 %v1316, %v1318
    %v1320 = vrot.slane %v1312, %v1319
    %v1322 = vunpack.c.l.s4 1966171168
    %v1323 = vunpack.c.0.s8 %v1322
    %v1324 = vlaneseq
    %v1325 = vshrl.u32 %v1324, 7
    %v1326 = vsub.s32 %v1323, %v1325
    %v1327 = vrot.slane %v1313, %v1326
    %v1328 = vcombine.low %v1320, %v1327
    %v1330 = vunpack.c.l.s4 1966171168
    %v1331 = vunpack.c.0.s8 %v1330
    %v1332 = vlaneseq
    %v1333 = vshrl.u32 %v1332, 7
    %v1334 = vsub.s32 %v1331, %v1333
    %v1335 = vrot.slane %v1328, %v1334
    %v1337 = vlaneseq
    %vm1338 = vcmp.ge.s32.totalorder %v1337, 0
    %vm1339 = vcmp.lt.s32.totalorder %v1337, 512
    %vm1340 = vmand %vm1338, %vm1339
    %1341 = vst.msk [vmem:[#allocation3] ss:$2 sm:$0xf] %vm1340, %v1335
    %v1342 = vsub.f32 1.0, %v1301
    %v1343 = vsub.f32 1.0, %v1303
    %v1344 = vsub.f32 1.0, %v1305
    %v1345 = vsub.f32 1.0, %v1307
    %v1350 = vcombine.low %v1342, %v1343
    %v1351 = vcombine.low %v1344, %v1345
    %v1353 = vunpack.c.l.s4 1966171168
    %v1354 = vunpack.c.0.s8 %v1353
    %v1355 = vlaneseq
    %v1356 = vshrl.u32 %v1355, 7
    %v1357 = vsub.s32 %v1354, %v1356
    %v1358 = vrot.slane %v1350, %v1357
    %v1360 = vunpack.c.l.s4 1966171168
    %v1361 = vunpack.c.0.s8 %v1360
    %v1362 = vlaneseq
    %v1363 = vshrl.u32 %v1362, 7
    %v1364 = vsub.s32 %v1361, %v1363
    %v1365 = vrot.slane %v1351, %v1364
    %v1366 = vcombine.low %v1358, %v1365
    %v1368 = vunpack.c.l.s4 1966171168
    %v1369 = vunpack.c.0.s8 %v1368
    %v1370 = vlaneseq
    %v1371 = vshrl.u32 %v1370, 7
    %v1372 = vsub.s32 %v1369, %v1371
    %v1373 = vrot.slane %v1366, %v1372
    %s1375 = scalar_lea.vmem [#allocation3], 1
    %1376 = vst.msk [vmem:[%s1375] ss:$2 sm:$0xf] %vm1340, %v1373
    // Predicated region
    $region22: #{tpu_custom_call.1} parent=1 // pred_check
      _
    $region23: #{tpu_custom_call.1} parent=1 // pred_check_branch
      %1378 = sbr.rel (0) target = $region25
    $region24: #{tpu_custom_call.1} parent=1 // pred_region
      %s1380 = ssub.s32 128, 128
      %1381 = vsyncadd [#allocation4], %s1380
      %s1383 = sshll.u32 [#allocation3], 4
      %s1384 = int_to_ptr.vmem [resolvable:$true] %s1383
      %1386 = dma.vmem_to_hbm [thread:$0]  %s1384, 128, %s5, [#allocation4]
    $region25: #{tpu_custom_call.1} parent=1 // pred_fallthru
      _
    // Predicated region
    $region26: #{tpu_custom_call.1} parent=1 // pred_check
      _
    $region27: #{tpu_custom_call.1} parent=1 // pred_check_branch
      %1388 = sbr.rel (0) target = $region29
    $region28: #{tpu_custom_call.1} parent=1 // pred_region
      %1389 = dma.done [#allocation4], 128
    $region29: #{tpu_custom_call.1} parent=1 // pred_fallthru
      _
    %1390 = vsyncpa [#allocation4], 1

</llo_original>
